<compile_context>
chip_gen: v7x
topology: tpu7x:2x2x1
jax: 0.10.0
libtpu: 0.0.40
codegen_flags: <defaults>
</compile_context>

<pallas_src>
import functools

import jax
import jax.numpy as jnp
from jax.experimental import pallas as pl
from jax.experimental.pallas import tpu as pltpu


def _round_up(a, m):
    return ((a + m - 1) // m) * m


def _vmem_bytes(tb, tn, te, d_in, x_bytes, w_bytes, out_bytes):
    """Rough double-buffered VMEM footprint of one pipeline configuration."""
    x_blk = 2 * tb * d_in * x_bytes            # x tile (double-buffered)
    w_blk = 2 * te * d_in * tn * w_bytes       # W tile (double-buffered)
    b_blk = 2 * 8 * tn * 4                     # bias tile (sublane-padded)
    o_blk = 2 * tb * tn * out_bytes            # output tile (double-buffered)
    acc = tb * tn * 4                          # f32 accumulator scratch
    return x_blk + w_blk + b_blk + o_blk + acc


def ensemble_kernel(x_ref, w_ref, b_ref, o_ref, acc_ref, *, inv_e, te):
    e = pl.program_id(2)

    @pl.when(e == 0)
    def _():
        acc_ref[...] = jnp.zeros_like(acc_ref)

    x = x_ref[...]
    acc = acc_ref[...]
    # Statically unrolled loop over the Te ensemble members in this block.
    for t in range(te):
        w_t = w_ref[t]
        if w_t.dtype != x.dtype:
            # Native MXU input dtype (e.g. bf16) instead of a slow f32 matmul.
            w_t = w_t.astype(x.dtype)
        acc = acc + jnp.dot(x, w_t, preferred_element_type=jnp.float32)
    acc_ref[...] = acc

    @pl.when(e == pl.num_programs(2) - 1)
    def _():
        # 1/E scale applied to the small (tb, tn) accumulator, then mean bias.
        y = acc_ref[...] * inv_e + b_ref[...].astype(jnp.float32)
        o_ref[...] = y.astype(o_ref.dtype)


def ensemble_forward(x, w_stack, b_stack, *, tn=None, tb=None, te=None):
    """x: (B, D_in), w_stack: (E, D_in, D_out), b_stack: (E, D_out)."""
    B, D_in = x.shape
    E, D_in_w, D_out = w_stack.shape
    assert D_in_w == D_in
    assert b_stack.shape == (E, D_out)

    x_bytes = jnp.dtype(x.dtype).itemsize
    w_bytes = jnp.dtype(w_stack.dtype).itemsize
    out_bytes = x_bytes

    # Per-core VMEM capacity -> explicit budget (portable v5e / v6e / v7x).
    try:
        vmem_cap = int(pltpu.get_tpu_info().vmem_capacity_bytes)
    except Exception:
        vmem_cap = 64 * 1024 * 1024  # conservative (v7x-sized) fallback
    vmem_limit = min((vmem_cap * 3) // 4, 96 * 1024 * 1024)
    budget = (vmem_limit * 17) // 20  # ~85%: headroom for compiler scratch

    # Batch tiling: pad B to a sublane multiple; tile large batches on a
    # "parallel" grid axis instead of assuming (B, D_in) fits in VMEM.
    B_p = _round_up(B, 8)
    if tb is None:
        tb = B_p if B_p <= 512 else 512
    B_p = _round_up(B_p, tb)
    n_b = B_p // tb

    # Output tiling: largest lane-dense tn that fits the VMEM budget,
    # preferring >= 2 output tiles (v7x megacore) whenever D_out allows it.
    if tn is None:
        cap = _round_up(D_out, 128)
        cands = sorted({min(c, cap) for c in (512, 384, 256, 128)}, reverse=True)
        tn = 128
        for c in cands:
            n_j_c = _round_up(D_out, c) // c
            if D_out > 128 and n_j_c < 2:
                continue
            if _vmem_bytes(tb, c, 1, D_in, x_bytes, w_bytes, out_bytes) <= budget:
                tn = c
                break
    D_out_p = _round_up(D_out, tn)
    n_j = D_out_p // tn

    # Ensemble-axis blocking (amortize per-grid-step overhead on small tiles).
    if te is None:
        te = 1
        for c in (4, 2):
            if E % c == 0 and _vmem_bytes(
                tb, tn, c, D_in, x_bytes, w_bytes, out_bytes
            ) <= budget:
                te = c
                break
    assert E % te == 0
    n_e = E // te

    # Zero padding is exact: padded rows/columns are sliced off afterwards.
    x_p = jnp.pad(x, ((0, B_p - B), (0, 0))) if B_p != B else x
    w_p = (
        jnp.pad(w_stack, ((0, 0), (0, 0), (0, D_out_p - D_out)))
        if D_out_p != D_out
        else w_stack
    )
    b_mean = jnp.mean(b_stack.astype(jnp.float32), axis=0).reshape(1, D_out)
    b_p = (
        jnp.pad(b_mean, ((0, 0), (0, D_out_p - D_out)))
        if D_out_p != D_out
        else b_mean
    )

    kernel = functools.partial(ensemble_kernel, inv_e=1.0 / E, te=te)

    out = pl.pallas_call(
        kernel,
        out_shape=jax.ShapeDtypeStruct((B_p, D_out_p), x.dtype),
        grid_spec=pltpu.PrefetchScalarGridSpec(
            num_scalar_prefetch=0,
            grid=(n_b, n_j, n_e),  # ensemble (reduction) axis last
            in_specs=[
                pl.BlockSpec((tb, D_in), lambda b, j, e: (b, 0)),       # x tile
                pl.BlockSpec((te, D_in, tn), lambda b, j, e: (e, 0, j)),  # W block
                pl.BlockSpec((1, tn), lambda b, j, e: (0, j)),          # mean bias
            ],
            out_specs=pl.BlockSpec((tb, tn), lambda b, j, e: (b, j)),   # resident
            scratch_shapes=[pltpu.VMEM((tb, tn), jnp.float32)],         # f32 acc
        ),
        compiler_params=pltpu.CompilerParams(
            dimension_semantics=("parallel", "parallel", "arbitrary"),
            vmem_limit_bytes=int(vmem_limit),
        ),
    )(x_p, w_p, b_p)

    if B_p != B or D_out_p != D_out:
        out = out[:B, :D_out]
    return out


if __name__ == "__main__":
    # Small deterministic setup: ensemble of E=4 Linear(D_in=32 -> D_out=128).
    B, D_in, D_out, E = 8, 32, 128, 4

    key = jax.random.PRNGKey(0)
    kx, kw, kb = jax.random.split(key, 3)

    x = jax.random.normal(kx, (B, D_in), dtype=jnp.float32)
    # Per-member parameters, pre-transposed so the kernel computes x @ W_e
    # (PyTorch's Linear stores (D_out, D_in) and applies x @ W^T).
    w_stack = jax.random.normal(kw, (E, D_in, D_out), dtype=jnp.float32) * 0.05
    b_stack = jax.random.normal(kb, (E, D_out), dtype=jnp.float32) * 0.01

    out = jax.block_until_ready(ensemble_forward(x, w_stack, b_stack))

    # Pure-JAX reference of the ensemble average.
    ref = jnp.mean(
        jnp.einsum("bd,edo->ebo", x, w_stack) + b_stack[:, None, :], axis=0
    )
    assert out.shape == (B, D_out)
    assert jnp.allclose(out, ref, atol=1e-4, rtol=1e-4)

    print("KERNEL_OK")
</pallas_src>

<mosaic_0001>
module attributes {stable_mosaic.version = 11 : i64} {
  func.func @ensemble_kernel(%arg0: i32, %arg1: i32, %arg2: i32, %arg3: memref<8x32xf32, #tpu.memory_space<vmem>>, %arg4: memref<4x32x128xf32, #tpu.memory_space<vmem>>, %arg5: memref<1x128xf32, #tpu.memory_space<vmem>>, %arg6: memref<8x128xf32, #tpu.memory_space<vmem>>, %arg7: memref<8x128xf32, #tpu.memory_space<vmem>>) attributes {dimension_semantics = [#tpu.dimension_semantics<parallel>, #tpu.dimension_semantics<parallel>, #tpu.dimension_semantics<arbitrary>], iteration_bounds = array<i64: 1, 1, 1>, scalar_prefetch = 0 : i64, scratch_operands = 1 : i64, tpu.core_type = #tpu.core_type<tc>, window_params = [{transform_indices = @transform_0, window_bounds = array<i64: 8, 32>}, {transform_indices = @transform_1, window_bounds = array<i64: 4, 32, 128>}, {transform_indices = @transform_2, window_bounds = array<i64: 1, 128>}, {transform_indices = @transform_3, window_bounds = array<i64: 8, 128>}]} {
    %c0_i32 = arith.constant 0 : i32
    %0 = arith.cmpi eq, %arg2, %c0_i32 : i32
    %1 = arith.extui %0 : i1 to i32
    %c0_i32_0 = arith.constant 0 : i32
    %2 = arith.cmpi ne, %1, %c0_i32_0 : i32
    scf.if %2 {
      %cst_20 = arith.constant 0.000000e+00 : f32
      %25 = vector.broadcast %cst_20 : f32 to vector<8x128xf32>
      %c0_21 = arith.constant 0 : index
      %c0_22 = arith.constant 0 : index
      %26 = vector.load %arg7[%c0_21, %c0_22] : memref<8x128xf32, #tpu.memory_space<vmem>>, vector<8x128xf32>
      tpu.vector_store %arg7[%c0_21, %c0_22], %25 {strides = array<i32>} : memref<8x128xf32, #tpu.memory_space<vmem>>, vector<8x128xf32>,
    } else {
    }
    %c0 = arith.constant 0 : index
    %c0_1 = arith.constant 0 : index
    %3 = vector.load %arg3[%c0, %c0_1] : memref<8x32xf32, #tpu.memory_space<vmem>>, vector<8x32xf32>
    %c0_2 = arith.constant 0 : index
    %c0_3 = arith.constant 0 : index
    %4 = vector.load %arg7[%c0_2, %c0_3] : memref<8x128xf32, #tpu.memory_space<vmem>>, vector<8x128xf32>
    %c0_4 = arith.constant 0 : index
    %c0_5 = arith.constant 0 : index
    %c0_6 = arith.constant 0 : index
    %5 = vector.load %arg4[%c0_4, %c0_5, %c0_6] : memref<4x32x128xf32, #tpu.memory_space<vmem>>, vector<1x32x128xf32>
    %6 = vector.shape_cast %5 : vector<1x32x128xf32> to vector<32x128xf32>
    %cst = arith.constant dense<0.000000e+00> : vector<8x128xf32>
    %7 = tpu.matmul %3, %6, %cst {dimension_numbers = #tpu.dot_dimension_numbers<[1], [0], [0], [1], [0, 0, 1, 1], [], []>} : vector<8x32xf32>, vector<32x128xf32>, vector<8x128xf32> -> vector<8x128xf32>
    %8 = arith.addf %4, %7 : vector<8x128xf32>
    %c1 = arith.constant 1 : index
    %c0_7 = arith.constant 0 : index
    %c0_8 = arith.constant 0 : index
    %9 = vector.load %arg4[%c1, %c0_7, %c0_8] : memref<4x32x128xf32, #tpu.memory_space<vmem>>, vector<1x32x128xf32>
    %10 = vector.shape_cast %9 : vector<1x32x128xf32> to vector<32x128xf32>
    %cst_9 = arith.constant dense<0.000000e+00> : vector<8x128xf32>
    %11 = tpu.matmul %3, %10, %cst_9 {dimension_numbers = #tpu.dot_dimension_numbers<[1], [0], [0], [1], [0, 0, 1, 1], [], []>} : vector<8x32xf32>, vector<32x128xf32>, vector<8x128xf32> -> vector<8x128xf32>
    %12 = arith.addf %8, %11 : vector<8x128xf32>
    %c2 = arith.constant 2 : index
    %c0_10 = arith.constant 0 : index
    %c0_11 = arith.constant 0 : index
    %13 = vector.load %arg4[%c2, %c0_10, %c0_11] : memref<4x32x128xf32, #tpu.memory_space<vmem>>, vector<1x32x128xf32>
    %14 = vector.shape_cast %13 : vector<1x32x128xf32> to vector<32x128xf32>
    %cst_12 = arith.constant dense<0.000000e+00> : vector<8x128xf32>
    %15 = tpu.matmul %3, %14, %cst_12 {dimension_numbers = #tpu.dot_dimension_numbers<[1], [0], [0], [1], [0, 0, 1, 1], [], []>} : vector<8x32xf32>, vector<32x128xf32>, vector<8x128xf32> -> vector<8x128xf32>
    %16 = arith.addf %12, %15 : vector<8x128xf32>
    %c3 = arith.constant 3 : index
    %c0_13 = arith.constant 0 : index
    %c0_14 = arith.constant 0 : index
    %17 = vector.load %arg4[%c3, %c0_13, %c0_14] : memref<4x32x128xf32, #tpu.memory_space<vmem>>, vector<1x32x128xf32>
    %18 = vector.shape_cast %17 : vector<1x32x128xf32> to vector<32x128xf32>
    %cst_15 = arith.constant dense<0.000000e+00> : vector<8x128xf32>
    %19 = tpu.matmul %3, %18, %cst_15 {dimension_numbers = #tpu.dot_dimension_numbers<[1], [0], [0], [1], [0, 0, 1, 1], [], []>} : vector<8x32xf32>, vector<32x128xf32>, vector<8x128xf32> -> vector<8x128xf32>
    %20 = arith.addf %16, %19 : vector<8x128xf32>
    %c0_16 = arith.constant 0 : index
    %c0_17 = arith.constant 0 : index
    %21 = vector.load %arg7[%c0_16, %c0_17] : memref<8x128xf32, #tpu.memory_space<vmem>>, vector<8x128xf32>
    tpu.vector_store %arg7[%c0_16, %c0_17], %20 {strides = array<i32>} : memref<8x128xf32, #tpu.memory_space<vmem>>, vector<8x128xf32>,
    %c0_i32_18 = arith.constant 0 : i32
    %22 = arith.cmpi eq, %arg2, %c0_i32_18 : i32
    %23 = arith.extui %22 : i1 to i32
    %c0_i32_19 = arith.constant 0 : i32
    %24 = arith.cmpi ne, %23, %c0_i32_19 : i32
    scf.if %24 {
      %c0_20 = arith.constant 0 : index
      %c0_21 = arith.constant 0 : index
      %25 = vector.load %arg7[%c0_20, %c0_21] : memref<8x128xf32, #tpu.memory_space<vmem>>, vector<8x128xf32>
      %cst_22 = arith.constant 2.500000e-01 : f32
      %26 = vector.broadcast %cst_22 : f32 to vector<8x128xf32>
      %27 = arith.mulf %25, %26 : vector<8x128xf32>
      %c0_23 = arith.constant 0 : index
      %c0_24 = arith.constant 0 : index
      %28 = vector.load %arg5[%c0_23, %c0_24] : memref<1x128xf32, #tpu.memory_space<vmem>>, vector<1x128xf32>
      %29 = vector.broadcast %28 : vector<1x128xf32> to vector<8x128xf32>
      %30 = arith.addf %27, %29 : vector<8x128xf32>
      %c0_25 = arith.constant 0 : index
      %c0_26 = arith.constant 0 : index
      %31 = vector.load %arg6[%c0_25, %c0_26] : memref<8x128xf32, #tpu.memory_space<vmem>>, vector<8x128xf32>
      tpu.vector_store %arg6[%c0_25, %c0_26], %30 {strides = array<i32>} : memref<8x128xf32, #tpu.memory_space<vmem>>, vector<8x128xf32>,
    } else {
    }
    return
  }
  func.func @transform_0(%arg0: i32, %arg1: i32, %arg2: i32) -> (i32, i32) {
    %c0_i32 = arith.constant 0 : i32
    %c0_i32_0 = arith.constant 0 : i32
    return %arg0, %c0_i32 : i32, i32
  }
  func.func @transform_1(%arg0: i32, %arg1: i32, %arg2: i32) -> (i32, i32, i32) {
    %c0_i32 = arith.constant 0 : i32
    %c0_i32_0 = arith.constant 0 : i32
    return %arg2, %c0_i32, %arg1 : i32, i32, i32
  }
  func.func @transform_2(%arg0: i32, %arg1: i32, %arg2: i32) -> (i32, i32) {
    %c0_i32 = arith.constant 0 : i32
    %c0_i32_0 = arith.constant 0 : i32
    return %c0_i32, %arg1 : i32, i32
  }
  func.func @transform_3(%arg0: i32, %arg1: i32, %arg2: i32) -> (i32, i32) {
    %c0_i32 = arith.constant 0 : i32
    return %arg0, %arg1 : i32, i32
  }
}

</mosaic_0001>

<llo_original>
// kernel: tpu_custom_call.1
$region0: #{tpu_custom_call.1}
  #allocation0 [shape = 'u32[]', space=smem, size = 0x4, offset = 0x4, fixed_abs, tag = 'smem constant byte address 0x4 - core index']
  #allocation1 [shape = 'u32[144,128]{1,0:T(1,128)}', space=vmem, size = 0x12000, scoped, tag = 'internal scratch']
  #allocation2 [shape = 'f32[8,128]{1,0:T(8,128)}', space=vmem, size = 0x1000, scoped, tag = 'scratch operand']
  %s0 = inlined_call_operand.hbm [shape: f32[8,32], index: 0, kind: input, shape index: {}]
  %s1 = inlined_call_operand.hbm [shape: f32[4,32,128], index: 1, kind: input, shape index: {}]
  %s2 = inlined_call_operand.vmem [shape: f32[1,128], index: 2, kind: input, shape index: {}]
  %s3 = inlined_call_operand.hbm [shape: f32[8,128], index: 3, kind: output, shape index: {}]
  %s4 = sld [smem:[#allocation0]]
  $region38: #{tpu_custom_call.1} parent=0
    _
  %s6 = ssub.s32 1, %s4
  %s7 = scalar_select 0, %s6, %s4
  $region1: #{tpu_custom_call.1} parent=0
    #allocation3 [shape = 'u8[4096]{0}', space=vmem, size = 0x1000, scoped, tag = 'input window, operand 0, single buffered']
    #allocation4 [shape = 's32[1]{0}', space=sflag, size = 0x4, scoped, tag = 'scoped memory for tpu_custom_call.1']
    #allocation5 [shape = 's32[1]{0}', space=sflag, size = 0x4, scoped, tag = 'scoped memory for tpu_custom_call.1']
    #allocation6 [shape = 'u8[65536]{0}', space=vmem, size = 0x10000, scoped, tag = 'input window, operand 1, single buffered']
    #allocation7 [shape = 's32[1]{0}', space=sflag, size = 0x4, scoped, tag = 'scoped memory for tpu_custom_call.1']
    #allocation8 [shape = 'u8[4096]{0}', space=vmem, size = 0x1000, scoped, tag = 'output window, operand 0, single buffered']
    %8 = vsyncpa [#allocation4], 0
    %9 = vsyncpa [#allocation7], 0
    %10 = vsyncpa [#allocation5], 0
    // Predicated region
    $region2: #{tpu_custom_call.1} parent=1 // pred_check
      _
    $region3: #{tpu_custom_call.1} parent=1 // pred_check_branch
      %12 = sbr.rel (0) target = $region5
    $region4: #{tpu_custom_call.1} parent=1 // pred_region
      %s14 = ssub.s32 128, 128
      %15 = vsyncadd [#allocation4], %s14
      %s17 = sshll.u32 [#allocation3], 4
      %s18 = int_to_ptr.vmem [resolvable:$true] %s17
      %20 = dma.hbm_to_vmem [thread:$0]  %s0, 128, %s18, [#allocation4]
    $region5: #{tpu_custom_call.1} parent=1 // pred_fallthru
      _
    // Predicated region
    $region6: #{tpu_custom_call.1} parent=1 // pred_check
      _
    $region7: #{tpu_custom_call.1} parent=1 // pred_check_branch
      %22 = sbr.rel (0) target = $region9
    $region8: #{tpu_custom_call.1} parent=1 // pred_region
      %s24 = ssub.s32 2048, 2048
      %25 = vsyncadd [#allocation7], %s24
      %s26 = sshll.u32 [#allocation6], 4
      %s27 = int_to_ptr.vmem [resolvable:$true] %s26
      %32 = dma.hbm_to_vmem [thread:$0]  %s1, 2048, %s27, [#allocation7], 128, 128, 8
    $region9: #{tpu_custom_call.1} parent=1 // pred_fallthru
      _
    // Predicated region
    $region10: #{tpu_custom_call.1} parent=1 // pred_check
      _
    $region11: #{tpu_custom_call.1} parent=1 // pred_check_branch
      %34 = sbr.rel (0) target = $region13
    $region12: #{tpu_custom_call.1} parent=1 // pred_region
      _
    $region13: #{tpu_custom_call.1} parent=1 // pred_fallthru
      _
    // Predicated region
    $region14: #{tpu_custom_call.1} parent=1 // pred_check
      _
    $region15: #{tpu_custom_call.1} parent=1 // pred_check_branch
      %36 = sbr.rel (0) target = $region17
    $region16: #{tpu_custom_call.1} parent=1 // pred_region
      %37 = dma.done [#allocation4], 128
    $region17: #{tpu_custom_call.1} parent=1 // pred_fallthru
      _
    // Predicated region
    $region18: #{tpu_custom_call.1} parent=1 // pred_check
      _
    $region19: #{tpu_custom_call.1} parent=1 // pred_check_branch
      %39 = sbr.rel (0) target = $region21
    $region20: #{tpu_custom_call.1} parent=1 // pred_region
      %40 = dma.done [#allocation7], 2048
    $region21: #{tpu_custom_call.1} parent=1 // pred_fallthru
      _
    %p41 = scmp.eq.s32.totalorder 0, 0
    // Predicated region
    $region22: #{tpu_custom_call.1} parent=1 // pred_check
      %p42 = pneg %p41
    $region23: #{tpu_custom_call.1} parent=1 // pred_check_branch
      %44 = sbr.rel (%p42) target = $region25
    $region24: #{tpu_custom_call.1} parent=1 // pred_region
      %45 = vst [vmem:[#allocation2] sm:$0xff] 0.0
    $region25: #{tpu_custom_call.1} parent=1 // pred_fallthru
      _
    %v46 = vld [vmem:[#allocation3] sm:$0xff]
    %v47 = vld [vmem:[#allocation2] sm:$0xff]
    %v48 = vld [vmem:[#allocation6] sm:$0xff]
    %v49 = vld [vmem:[#allocation6 + $0x8] sm:$0xff]
    %v50 = vld [vmem:[#allocation6 + $0x10] sm:$0xff]
    %v51 = vld [vmem:[#allocation6 + $0x18] sm:$0xff]
    %vm52 = vcmask 261120
    %v54 = vsel %vm52, %v46, 0
    %56 = vmatprep.subr.mxu0 0.0
    %57 = vmatpush1.msra.mxu0 %v48
    %58 = vmatprep.subr.mxu0 0.0
    %59 = vmatpush1.msra.mxu0 %v49
    %60 = vmatprep.subr.mxu0 0.0
    %61 = vmatpush1.msra.mxu0 %v50
    %62 = vmatprep.subr.mxu0 0.0
    %63 = vmatpush1.msra.mxu0 %v51
    %64 = vmatprep.subr.mxu0 0.0
    %65 = vmatpush1.msra.mxu0 0.0
    %66 = vmatprep.subr.mxu0 0.0
    %67 = vmatpush1.msra.mxu0 0.0
    %68 = vmatprep.subr.mxu0 0.0
    %69 = vmatpush1.msra.mxu0 0.0
    %70 = vmatprep.subr.mxu0 0.0
    %71 = vmatpush1.msra.mxu0 0.0
    %72 = vmatprep.subr.mxu0 0.0
    %73 = vmatpush1.msra.mxu0 0.0
    %74 = vmatprep.subr.mxu0 0.0
    %75 = vmatpush1.msra.mxu0 0.0
    %76 = vmatprep.subr.mxu0 0.0
    %77 = vmatpush1.msra.mxu0 0.0
    %78 = vmatprep.subr.mxu0 0.0
    %79 = vmatpush1.msra.mxu0 0.0
    %80 = vmatprep.subr.mxu0 0.0
    %81 = vmatpush1.msra.mxu0 0.0
    %82 = vmatprep.subr.mxu0 0.0
    %83 = vmatpush1.msra.mxu0 0.0
    %84 = vmatprep.subr.mxu0 0.0
    %85 = vmatpush1.msra.mxu0 0.0
    %86 = vmatprep.subr.mxu0 0.0
    %87 = vmatpush1.msra.mxu0 0.0
    %88 = vmatprep.subr.mxu0 0.0
    %89 = vmatpush1.msra.mxu0 0.0
    %90 = vmatprep.subr.mxu0 0.0
    %91 = vmatpush1.msra.mxu0 0.0
    %92 = vmatprep.subr.mxu0 0.0
    %93 = vmatpush1.msra.mxu0 0.0
    %94 = vmatprep.subr.mxu0 0.0
    %95 = vmatpush1.msra.mxu0 0.0
    %96 = vmatprep.subr.mxu0 0.0
    %97 = vmatpush1.msra.mxu0 0.0
    %98 = vmatprep.subr.mxu0 0.0
    %99 = vmatpush1.msra.mxu0 0.0
    %100 = vmatprep.subr.mxu0 0.0
    %101 = vmatpush1.msra.mxu0 0.0
    %102 = vmatprep.subr.mxu0 0.0
    %103 = vmatpush1.msra.mxu0 0.0
    %104 = vmatprep.subr.mxu0 0.0
    %105 = vmatpush1.msra.mxu0 0.0
    %106 = vmatprep.subr.mxu0 0.0
    %107 = vmatpush1.msra.mxu0 0.0
    %108 = vmatprep.subr.mxu0 0.0
    %109 = vmatpush1.msra.mxu0 0.0
    %110 = vmatprep.subr.mxu0 0.0
    %111 = vmatpush1.msra.mxu0 0.0
    %112 = vmatprep.subr.mxu0 0.0
    %113 = vmatpush1.msra.mxu0 0.0
    %114 = vmatprep.subr.mxu0 0.0
    %115 = vmatpush1.msra.mxu0 0.0
    %116 = vmatprep.subr.mxu0 0.0
    %117 = vmatpush1.msra.mxu0 0.0
    %118 = vmatprep.subr.mxu0 0.0
    %119 = vmatpush1.msra.mxu0 0.0
    %120 = vmatprep.mubr.f32.mxu0 0.0
    %121 = vmatmul.mubr.f32.gmra.mrb[0].mxu0 %v54
    %v122 = vpop.f32.mrb[0].mxu0
    %v123 = vadd.f32 0.0, %v122
    %v124 = vpop.f32.mrb[0].mxu0
    %125 = vdwg.mxu0
    %v126 = vadd.f32 %v47, %v123
    %s127 = scalar_lea.vmem [#allocation6], 32
    %v128 = vld [vmem:[%s127] sm:$0xff]
    %v129 = vld [vmem:[%s127 + $0x8] sm:$0xff]
    %v130 = vld [vmem:[%s127 + $0x10] sm:$0xff]
    %v131 = vld [vmem:[%s127 + $0x18] sm:$0xff]
    %132 = vmatprep.subr.mxu0 0.0
    %133 = vmatpush1.msra.mxu0 %v128
    %134 = vmatprep.subr.mxu0 0.0
    %135 = vmatpush1.msra.mxu0 %v129
    %136 = vmatprep.subr.mxu0 0.0
    %137 = vmatpush1.msra.mxu0 %v130
    %138 = vmatprep.subr.mxu0 0.0
    %139 = vmatpush1.msra.mxu0 %v131
    %140 = vmatprep.subr.mxu0 0.0
    %141 = vmatpush1.msra.mxu0 0.0
    %142 = vmatprep.subr.mxu0 0.0
    %143 = vmatpush1.msra.mxu0 0.0
    %144 = vmatprep.subr.mxu0 0.0
    %145 = vmatpush1.msra.mxu0 0.0
    %146 = vmatprep.subr.mxu0 0.0
    %147 = vmatpush1.msra.mxu0 0.0
    %148 = vmatprep.subr.mxu0 0.0
    %149 = vmatpush1.msra.mxu0 0.0
    %150 = vmatprep.subr.mxu0 0.0
    %151 = vmatpush1.msra.mxu0 0.0
    %152 = vmatprep.subr.mxu0 0.0
    %153 = vmatpush1.msra.mxu0 0.0
    %154 = vmatprep.subr.mxu0 0.0
    %155 = vmatpush1.msra.mxu0 0.0
    %156 = vmatprep.subr.mxu0 0.0
    %157 = vmatpush1.msra.mxu0 0.0
    %158 = vmatprep.subr.mxu0 0.0
    %159 = vmatpush1.msra.mxu0 0.0
    %160 = vmatprep.subr.mxu0 0.0
    %161 = vmatpush1.msra.mxu0 0.0
    %162 = vmatprep.subr.mxu0 0.0
    %163 = vmatpush1.msra.mxu0 0.0
    %164 = vmatprep.subr.mxu0 0.0
    %165 = vmatpush1.msra.mxu0 0.0
    %166 = vmatprep.subr.mxu0 0.0
    %167 = vmatpush1.msra.mxu0 0.0
    %168 = vmatprep.subr.mxu0 0.0
    %169 = vmatpush1.msra.mxu0 0.0
    %170 = vmatprep.subr.mxu0 0.0
    %171 = vmatpush1.msra.mxu0 0.0
    %172 = vmatprep.subr.mxu0 0.0
    %173 = vmatpush1.msra.mxu0 0.0
    %174 = vmatprep.subr.mxu0 0.0
    %175 = vmatpush1.msra.mxu0 0.0
    %176 = vmatprep.subr.mxu0 0.0
    %177 = vmatpush1.msra.mxu0 0.0
    %178 = vmatprep.subr.mxu0 0.0
    %179 = vmatpush1.msra.mxu0 0.0
    %180 = vmatprep.subr.mxu0 0.0
    %181 = vmatpush1.msra.mxu0 0.0
    %182 = vmatprep.subr.mxu0 0.0
    %183 = vmatpush1.msra.mxu0 0.0
    %184 = vmatprep.subr.mxu0 0.0
    %185 = vmatpush1.msra.mxu0 0.0
    %186 = vmatprep.subr.mxu0 0.0
    %187 = vmatpush1.msra.mxu0 0.0
    %188 = vmatprep.subr.mxu0 0.0
    %189 = vmatpush1.msra.mxu0 0.0
    %190 = vmatprep.subr.mxu0 0.0
    %191 = vmatpush1.msra.mxu0 0.0
    %192 = vmatprep.subr.mxu0 0.0
    %193 = vmatpush1.msra.mxu0 0.0
    %194 = vmatprep.subr.mxu0 0.0
    %195 = vmatpush1.msra.mxu0 0.0
    %196 = vmatprep.mubr.f32.mxu0 0.0
    %197 = vmatmul.mubr.f32.gmra.mrb[0].mxu0 %v54
    %v198 = vpop.f32.mrb[0].mxu0
    %v199 = vadd.f32 0.0, %v198
    %v200 = vpop.f32.mrb[0].mxu0
    %201 = vdwg.mxu0
    %v202 = vadd.f32 %v126, %v199
    %s203 = scalar_lea.vmem [#allocation6], 64
    %v204 = vld [vmem:[%s203] sm:$0xff]
    %v205 = vld [vmem:[%s203 + $0x8] sm:$0xff]
    %v206 = vld [vmem:[%s203 + $0x10] sm:$0xff]
    %v207 = vld [vmem:[%s203 + $0x18] sm:$0xff]
    %208 = vmatprep.subr.mxu0 0.0
    %209 = vmatpush1.msra.mxu0 %v204
    %210 = vmatprep.subr.mxu0 0.0
    %211 = vmatpush1.msra.mxu0 %v205
    %212 = vmatprep.subr.mxu0 0.0
    %213 = vmatpush1.msra.mxu0 %v206
    %214 = vmatprep.subr.mxu0 0.0
    %215 = vmatpush1.msra.mxu0 %v207
    %216 = vmatprep.subr.mxu0 0.0
    %217 = vmatpush1.msra.mxu0 0.0
    %218 = vmatprep.subr.mxu0 0.0
    %219 = vmatpush1.msra.mxu0 0.0
    %220 = vmatprep.subr.mxu0 0.0
    %221 = vmatpush1.msra.mxu0 0.0
    %222 = vmatprep.subr.mxu0 0.0
    %223 = vmatpush1.msra.mxu0 0.0
    %224 = vmatprep.subr.mxu0 0.0
    %225 = vmatpush1.msra.mxu0 0.0
    %226 = vmatprep.subr.mxu0 0.0
    %227 = vmatpush1.msra.mxu0 0.0
    %228 = vmatprep.subr.mxu0 0.0
    %229 = vmatpush1.msra.mxu0 0.0
    %230 = vmatprep.subr.mxu0 0.0
    %231 = vmatpush1.msra.mxu0 0.0
    %232 = vmatprep.subr.mxu0 0.0
    %233 = vmatpush1.msra.mxu0 0.0
    %234 = vmatprep.subr.mxu0 0.0
    %235 = vmatpush1.msra.mxu0 0.0
    %236 = vmatprep.subr.mxu0 0.0
    %237 = vmatpush1.msra.mxu0 0.0
    %238 = vmatprep.subr.mxu0 0.0
    %239 = vmatpush1.msra.mxu0 0.0
    %240 = vmatprep.subr.mxu0 0.0
    %241 = vmatpush1.msra.mxu0 0.0
    %242 = vmatprep.subr.mxu0 0.0
    %243 = vmatpush1.msra.mxu0 0.0
    %244 = vmatprep.subr.mxu0 0.0
    %245 = vmatpush1.msra.mxu0 0.0
    %246 = vmatprep.subr.mxu0 0.0
    %247 = vmatpush1.msra.mxu0 0.0
    %248 = vmatprep.subr.mxu0 0.0
    %249 = vmatpush1.msra.mxu0 0.0
    %250 = vmatprep.subr.mxu0 0.0
    %251 = vmatpush1.msra.mxu0 0.0
    %252 = vmatprep.subr.mxu0 0.0
    %253 = vmatpush1.msra.mxu0 0.0
    %254 = vmatprep.subr.mxu0 0.0
    %255 = vmatpush1.msra.mxu0 0.0
    %256 = vmatprep.subr.mxu0 0.0
    %257 = vmatpush1.msra.mxu0 0.0
    %258 = vmatprep.subr.mxu0 0.0
    %259 = vmatpush1.msra.mxu0 0.0
    %260 = vmatprep.subr.mxu0 0.0
    %261 = vmatpush1.msra.mxu0 0.0
    %262 = vmatprep.subr.mxu0 0.0
    %263 = vmatpush1.msra.mxu0 0.0
    %264 = vmatprep.subr.mxu0 0.0
    %265 = vmatpush1.msra.mxu0 0.0
    %266 = vmatprep.subr.mxu0 0.0
    %267 = vmatpush1.msra.mxu0 0.0
    %268 = vmatprep.subr.mxu0 0.0
    %269 = vmatpush1.msra.mxu0 0.0
    %270 = vmatprep.subr.mxu0 0.0
    %271 = vmatpush1.msra.mxu0 0.0
    %272 = vmatprep.mubr.f32.mxu0 0.0
    %273 = vmatmul.mubr.f32.gmra.mrb[0].mxu0 %v54
    %v274 = vpop.f32.mrb[0].mxu0
    %v275 = vadd.f32 0.0, %v274
    %v276 = vpop.f32.mrb[0].mxu0
    %277 = vdwg.mxu0
    %v278 = vadd.f32 %v202, %v275
    %s279 = scalar_lea.vmem [#allocation6], 96
    %v280 = vld [vmem:[%s279] sm:$0xff]
    %v281 = vld [vmem:[%s279 + $0x8] sm:$0xff]
    %v282 = vld [vmem:[%s279 + $0x10] sm:$0xff]
    %v283 = vld [vmem:[%s279 + $0x18] sm:$0xff]
    %284 = vmatprep.subr.mxu0 0.0
    %285 = vmatpush1.msra.mxu0 %v280
    %286 = vmatprep.subr.mxu0 0.0
    %287 = vmatpush1.msra.mxu0 %v281
    %288 = vmatprep.subr.mxu0 0.0
    %289 = vmatpush1.msra.mxu0 %v282
    %290 = vmatprep.subr.mxu0 0.0
    %291 = vmatpush1.msra.mxu0 %v283
    %292 = vmatprep.subr.mxu0 0.0
    %293 = vmatpush1.msra.mxu0 0.0
    %294 = vmatprep.subr.mxu0 0.0
    %295 = vmatpush1.msra.mxu0 0.0
    %296 = vmatprep.subr.mxu0 0.0
    %297 = vmatpush1.msra.mxu0 0.0
    %298 = vmatprep.subr.mxu0 0.0
    %299 = vmatpush1.msra.mxu0 0.0
    %300 = vmatprep.subr.mxu0 0.0
    %301 = vmatpush1.msra.mxu0 0.0
    %302 = vmatprep.subr.mxu0 0.0
    %303 = vmatpush1.msra.mxu0 0.0
    %304 = vmatprep.subr.mxu0 0.0
    %305 = vmatpush1.msra.mxu0 0.0
    %306 = vmatprep.subr.mxu0 0.0
    %307 = vmatpush1.msra.mxu0 0.0
    %308 = vmatprep.subr.mxu0 0.0
    %309 = vmatpush1.msra.mxu0 0.0
    %310 = vmatprep.subr.mxu0 0.0
    %311 = vmatpush1.msra.mxu0 0.0
    %312 = vmatprep.subr.mxu0 0.0
    %313 = vmatpush1.msra.mxu0 0.0
    %314 = vmatprep.subr.mxu0 0.0
    %315 = vmatpush1.msra.mxu0 0.0
    %316 = vmatprep.subr.mxu0 0.0
    %317 = vmatpush1.msra.mxu0 0.0
    %318 = vmatprep.subr.mxu0 0.0
    %319 = vmatpush1.msra.mxu0 0.0
    %320 = vmatprep.subr.mxu0 0.0
    %321 = vmatpush1.msra.mxu0 0.0
    %322 = vmatprep.subr.mxu0 0.0
    %323 = vmatpush1.msra.mxu0 0.0
    %324 = vmatprep.subr.mxu0 0.0
    %325 = vmatpush1.msra.mxu0 0.0
    %326 = vmatprep.subr.mxu0 0.0
    %327 = vmatpush1.msra.mxu0 0.0
    %328 = vmatprep.subr.mxu0 0.0
    %329 = vmatpush1.msra.mxu0 0.0
    %330 = vmatprep.subr.mxu0 0.0
    %331 = vmatpush1.msra.mxu0 0.0
    %332 = vmatprep.subr.mxu0 0.0
    %333 = vmatpush1.msra.mxu0 0.0
    %334 = vmatprep.subr.mxu0 0.0
    %335 = vmatpush1.msra.mxu0 0.0
    %336 = vmatprep.subr.mxu0 0.0
    %337 = vmatpush1.msra.mxu0 0.0
    %338 = vmatprep.subr.mxu0 0.0
    %339 = vmatpush1.msra.mxu0 0.0
    %340 = vmatprep.subr.mxu0 0.0
    %341 = vmatpush1.msra.mxu0 0.0
    %342 = vmatprep.subr.mxu0 0.0
    %343 = vmatpush1.msra.mxu0 0.0
    %344 = vmatprep.subr.mxu0 0.0
    %345 = vmatpush1.msra.mxu0 0.0
    %346 = vmatprep.subr.mxu0 0.0
    %347 = vmatpush1.msra.mxu0 0.0
    %348 = vmatprep.mubr.f32.mxu0 0.0
    %349 = vmatmul.mubr.f32.gmra.mrb[0].mxu0 %v54
    %v350 = vpop.f32.mrb[0].mxu0
    %v351 = vadd.f32 0.0, %v350
    %v352 = vpop.f32.mrb[0].mxu0
    %353 = vdwg.mxu0
    %v354 = vadd.f32 %v278, %v351
    %355 = vst [vmem:[#allocation2] sm:$0xff] %v354
    // Predicated region
    $region26: #{tpu_custom_call.1} parent=1 // pred_check
      %p356 = pneg %p41
    $region27: #{tpu_custom_call.1} parent=1 // pred_check_branch
      %358 = sbr.rel (%p356) target = $region29
    $region28: #{tpu_custom_call.1} parent=1 // pred_region
      %v359 = vld [vmem:[#allocation2] sm:$0xff]
      %v360 = vmul.f32 %v359, 0.25
      %v361 = vld [vmem:[%s2] sm:$0x1]
      %v363 = vlaneseq
      %v364 = vshrl.u32 %v363, 7
      %v365 = vsub.s32 0, %v364
      %v366 = vrot.slane %v361, %v365
      %v368 = vadd.f32 %v360, %v366
      %369 = vst [vmem:[#allocation8] sm:$0xff] %v368
    $region29: #{tpu_custom_call.1} parent=1 // pred_fallthru
      _
    // Predicated region
    $region30: #{tpu_custom_call.1} parent=1 // pred_check
      _
    $region31: #{tpu_custom_call.1} parent=1 // pred_check_branch
      %371 = sbr.rel (0) target = $region33
    $region32: #{tpu_custom_call.1} parent=1 // pred_region
      %s373 = ssub.s32 128, 128
      %374 = vsyncadd [#allocation5], %s373
      %s376 = sshll.u32 [#allocation8], 4
      %s377 = int_to_ptr.vmem [resolvable:$true] %s376
      %379 = dma.vmem_to_hbm [thread:$0]  %s377, 128, %s3, [#allocation5]
    $region33: #{tpu_custom_call.1} parent=1 // pred_fallthru
      _
    // Predicated region
    $region34: #{tpu_custom_call.1} parent=1 // pred_check
      _
    $region35: #{tpu_custom_call.1} parent=1 // pred_check_branch
      %381 = sbr.rel (0) target = $region37
    $region36: #{tpu_custom_call.1} parent=1 // pred_region
      %382 = dma.done [#allocation5], 128
    $region37: #{tpu_custom_call.1} parent=1 // pred_fallthru
      _
    %383 = vsyncpa [#allocation4], 1
    %384 = vsyncpa [#allocation7], 1
    %385 = vsyncpa [#allocation5], 1

</llo_original>
